<compile_context>
chip_gen: v7x
topology: tpu7x:2x2x1
jax: 0.10.0
libtpu: 0.0.40
codegen_flags: <defaults>
</compile_context>

<pallas_src>
import functools

import jax
import jax.numpy as jnp
from jax.experimental import pallas as pl
from jax.experimental.pallas import tpu as pltpu


# ----------------------------------------------------------------------------
# Kernel bodies.
# ----------------------------------------------------------------------------

def _ln_math(x, w, b, eps):
    """LayerNorm over axis=1 of a block (single-pass mean / E[x^2])."""
    x = x.astype(jnp.float32)
    inv_c = jnp.float32(1.0 / x.shape[1])
    mean = jnp.sum(x, axis=1, keepdims=True) * inv_c
    mean_sq = jnp.sum(x * x, axis=1, keepdims=True) * inv_c
    var = jnp.maximum(mean_sq - mean * mean, jnp.float32(0.0))  # unbiased=False
    inv = jax.lax.rsqrt(var + jnp.float32(eps))                 # EUP slot
    y = x * inv - mean * inv                                    # no 'centered' temp
    if w is not None:
        y = y * w.astype(jnp.float32) + b.astype(jnp.float32)
    return y


def _ln_kernel_affine(eps, x_ref, w_ref, b_ref, o_ref):
    o_ref[...] = _ln_math(x_ref[...], w_ref[...], b_ref[...], eps).astype(o_ref.dtype)


def _ln_kernel_plain(eps, x_ref, o_ref):
    o_ref[...] = _ln_math(x_ref[...], None, None, eps).astype(o_ref.dtype)


# ----------------------------------------------------------------------------
# Tile planning.
# ----------------------------------------------------------------------------

def _tpu_vmem_capacity():
    try:
        return int(pltpu.get_tpu_info().vmem_capacity_bytes)
    except Exception:
        return 64 << 20  # assume the smallest per-core VMEM (v7x) if unknown


def _vmem_limit(vmem_cap):
    # Leave headroom below physical capacity: 48 MiB on v7x (64 MiB/core),
    # 96 MiB on v5e/v6e (128 MiB).
    return int(min(96 << 20, max(vmem_cap // 2, vmem_cap - (16 << 20))))


def _block_byte_target(itemsize, vmem_cap):
    # Live footprint ~= (2 in + 2 out) blocks in the input dtype plus ~3
    # full-tile f32 temporaries inside the kernel.
    budget = (20 << 20) if vmem_cap <= (64 << 20) else (32 << 20)
    factor = 4.0 + 12.0 / itemsize
    return max(512 << 10, min(4 << 20, int(budget / factor)))


def _largest_divisor_leq(n, k):
    k = max(1, min(n, k))
    while n % k:
        k -= 1
    return k


def _plan_lane_blocks(B, C, NL, itemsize, target_bytes):
    """Block sizes (TB, TK) for the reshaped (B, C, NL, 128) layout."""
    unit = C * 128 * itemsize                       # one NL-row of one batch elem
    tk = int(target_bytes // unit)
    if tk >= NL:
        tk = NL
        tb = _largest_divisor_leq(B, max(1, int(target_bytes // (NL * unit))))
    else:
        tb = 1
        tk = min(NL, max(8, (tk // 8) * 8)) if NL >= 8 else NL
    # Keep >= 2 grid steps so both v7x TensorCores get work.
    if (B // tb) * pl.cdiv(NL, tk) < 2:
        if tb > 1:
            tb = _largest_divisor_leq(B, tb // 2)
        elif tk >= 16:
            tk = max(8, ((tk // 2) // 8) * 8)
    return tb, tk


def _plan_direct_blocks(B, C, L, itemsize, target_bytes):
    """Block sizes (TB, TL) for the direct (B, C, L) layout (ragged L)."""
    slab = C * L * itemsize                         # one full batch element
    if slab <= target_bytes:
        tl = L
        tb = _largest_divisor_leq(B, max(1, int(target_bytes // slab)))
    else:
        tb = 1
        tl = max(128, int(target_bytes // (C * 128 * itemsize)) * 128)
        tl = min(tl, L)
    if (B // tb) * pl.cdiv(L, tl) < 2:
        if tb > 1:
            tb = _largest_divisor_leq(B, tb // 2)
        elif L >= 256:
            tl = max(128, ((tl // 2) // 128) * 128)
    return tb, tl


def _check_vmem(block_bytes, itemsize, limit):
    footprint = 4 * block_bytes + 3 * (block_bytes * 4 // itemsize)
    if footprint > limit:
        # TODO(synk): add a channel-split (two-pass / accumulating) path for
        # very large num_channels instead of erroring out.
        raise ValueError(
            f"LayerNorm1D block of {block_bytes} B needs ~{footprint} B of "
            f"VMEM (> limit {limit}); num_channels too large for the "
            "single-pass kernel.")


# ----------------------------------------------------------------------------
# Public wrapper.
# ----------------------------------------------------------------------------

def layer_norm_1d(x, weight=None, bias=None, eps=1e-5):
    """LayerNorm over the channel dim of x: (B, C, L).

    weight / bias: (1, C, 1) affine params (or None for affine=False).
    Matches torch: mean/var over dim=1 (unbiased=False), then affine.
    """
    B, C, L = x.shape
    itemsize = jnp.dtype(x.dtype).itemsize
    vmem_cap = _tpu_vmem_capacity()
    vmem_limit = _vmem_limit(vmem_cap)
    target = _block_byte_target(itemsize, vmem_cap)

    affine = weight is not None and bias is not None
    if affine:
        w = jnp.asarray(weight).reshape(1, C, 1)
        b = jnp.asarray(bias).reshape(1, C, 1)

    if L % 128 == 0:
        # Lane-folded layout: (B, C, L) -> (B, C, NL, 128) is a free contiguous
        # reshape; (TK, 128) blocks are fully (8,128)-packed even for tiny C,
        # and the channel reduction is plain VPU adds across C planes.
        NL = L // 128
        tb, tk = _plan_lane_blocks(B, C, NL, itemsize, target)
        block_bytes = tb * C * tk * 128 * itemsize
        _check_vmem(block_bytes, itemsize, vmem_limit)

        xr = x.reshape(B, C, NL, 128)
        grid = (B // tb, pl.cdiv(NL, tk))
        x_spec = pl.BlockSpec((tb, C, tk, 128), lambda bi, li: (bi, 0, li, 0))
        o_spec = pl.BlockSpec((tb, C, tk, 128), lambda bi, li: (bi, 0, li, 0))
        out_shape = jax.ShapeDtypeStruct((B, C, NL, 128), x.dtype)

        if affine:
            kernel = functools.partial(_ln_kernel_affine, eps)
            in_specs = [
                x_spec,
                pl.BlockSpec((1, C, 1, 1), lambda bi, li: (0, 0, 0, 0)),
                pl.BlockSpec((1, C, 1, 1), lambda bi, li: (0, 0, 0, 0)),
            ]
            operands = (xr, w.reshape(1, C, 1, 1), b.reshape(1, C, 1, 1))
        else:
            kernel = functools.partial(_ln_kernel_plain, eps)
            in_specs = [x_spec]
            operands = (xr,)
    else:
        # Ragged L: direct (TB, C, TL) blocks, no wrapper pad/slice.  TL is the
        # full extent (small slabs) or a multiple of 128 with a cdiv grid.
        tb, tl = _plan_direct_blocks(B, C, L, itemsize, target)
        block_bytes = tb * C * tl * itemsize
        _check_vmem(block_bytes, itemsize, vmem_limit)

        grid = (B // tb, pl.cdiv(L, tl))
        x_spec = pl.BlockSpec((tb, C, tl), lambda bi, li: (bi, 0, li))
        o_spec = pl.BlockSpec((tb, C, tl), lambda bi, li: (bi, 0, li))
        out_shape = jax.ShapeDtypeStruct((B, C, L), x.dtype)

        if affine:
            kernel = functools.partial(_ln_kernel_affine, eps)
            in_specs = [
                x_spec,
                pl.BlockSpec((1, C, 1), lambda bi, li: (0, 0, 0)),
                pl.BlockSpec((1, C, 1), lambda bi, li: (0, 0, 0)),
            ]
            operands = (x, w, b)
        else:
            kernel = functools.partial(_ln_kernel_plain, eps)
            in_specs = [x_spec]
            operands = (x,)

    out = pl.pallas_call(
        kernel,
        out_shape=out_shape,
        grid_spec=pltpu.PrefetchScalarGridSpec(
            num_scalar_prefetch=0,
            grid=grid,
            in_specs=in_specs,
            out_specs=o_spec,
        ),
        compiler_params=pltpu.CompilerParams(
            dimension_semantics=("parallel", "parallel"),
            vmem_limit_bytes=vmem_limit,
        ),
    )(*operands)

    return out.reshape(B, C, L)


# ----------------------------------------------------------------------------
# Self-test.
# ----------------------------------------------------------------------------

def _reference_ln1d(x, w, b, eps):
    xf = x.astype(jnp.float32)
    mean = jnp.mean(xf, axis=1, keepdims=True)
    var = jnp.mean((xf - mean) ** 2, axis=1, keepdims=True)
    y = (xf - mean) / jnp.sqrt(var + eps)
    if w is not None:
        y = y * w + b
    return y.astype(x.dtype)


if __name__ == "__main__":
    EPS = 1e-5
    key = jax.random.PRNGKey(0)
    k1, k2, k3, k4, k5 = jax.random.split(key, 5)

    # Case 1: affine, L multiple of 128 (lane-folded path, small C).
    B, C, L = 2, 4, 256
    x = jax.random.normal(k1, (B, C, L), jnp.float32)
    w = 1.0 + 0.1 * jax.random.normal(k2, (1, C, 1), jnp.float32)
    b = 0.1 * jax.random.normal(k3, (1, C, 1), jnp.float32)
    out = layer_norm_1d(x, w, b, eps=EPS)
    jax.block_until_ready(out)
    assert out.shape == (B, C, L)
    assert bool(jnp.allclose(out, _reference_ln1d(x, w, b, EPS),
                             atol=1e-4, rtol=1e-4))

    # Case 2: no affine, ragged L (direct path, no pad/slice in the wrapper).
    x2 = jax.random.normal(k4, (2, 4, 200), jnp.float32)
    out2 = layer_norm_1d(x2, None, None, eps=EPS)
    jax.block_until_ready(out2)
    assert bool(jnp.allclose(out2, _reference_ln1d(x2, None, None, EPS),
                             atol=1e-4, rtol=1e-4))

    # Case 3: affine, C multiple of 8, longer L (lane + batch folding).
    B3, C3, L3 = 2, 8, 1024
    x3 = jax.random.normal(k5, (B3, C3, L3), jnp.float32)
    w3 = jnp.ones((1, C3, 1), jnp.float32)
    b3 = jnp.zeros((1, C3, 1), jnp.float32)
    out3 = layer_norm_1d(x3, w3, b3, eps=EPS)
    jax.block_until_ready(out3)
    assert bool(jnp.allclose(out3, _reference_ln1d(x3, w3, b3, EPS),
                             atol=1e-4, rtol=1e-4))

    print("KERNEL_OK")
</pallas_src>

<mosaic_0001>
module attributes {stable_mosaic.version = 11 : i64} {
  func.func @_ln_kernel_affine(%arg0: i32, %arg1: i32, %arg2: memref<1x4x2x128xf32, #tpu.memory_space<vmem>>, %arg3: memref<1x4x1x1xf32, #tpu.memory_space<vmem>>, %arg4: memref<1x4x1x1xf32, #tpu.memory_space<vmem>>, %arg5: memref<1x4x2x128xf32, #tpu.memory_space<vmem>>) attributes {dimension_semantics = [#tpu.dimension_semantics<parallel>, #tpu.dimension_semantics<parallel>], iteration_bounds = array<i64: 2, 1>, scalar_prefetch = 0 : i64, scratch_operands = 0 : i64, tpu.core_type = #tpu.core_type<tc>, window_params = [{transform_indices = @transform_0, window_bounds = array<i64: 1, 4, 2, 128>}, {pipeline_mode = #tpu.pipeline_mode<synchronous>, transform_indices = @transform_1, window_bounds = array<i64: 1, 4, 1, 1>}, {pipeline_mode = #tpu.pipeline_mode<synchronous>, transform_indices = @transform_2, window_bounds = array<i64: 1, 4, 1, 1>}, {transform_indices = @transform_3, window_bounds = array<i64: 1, 4, 2, 128>}]} {
    %c0 = arith.constant 0 : index
    %c0_0 = arith.constant 0 : index
    %c0_1 = arith.constant 0 : index
    %c0_2 = arith.constant 0 : index
    %0 = vector.load %arg2[%c0, %c0_0, %c0_1, %c0_2] : memref<1x4x2x128xf32, #tpu.memory_space<vmem>>, vector<1x4x2x128xf32>
    %c0_3 = arith.constant 0 : index
    %c0_4 = arith.constant 0 : index
    %c0_5 = arith.constant 0 : index
    %c0_6 = arith.constant 0 : index
    %1 = vector.load %arg3[%c0_3, %c0_4, %c0_5, %c0_6] : memref<1x4x1x1xf32, #tpu.memory_space<vmem>>, vector<1x4x1x1xf32>
    %c0_7 = arith.constant 0 : index
    %c0_8 = arith.constant 0 : index
    %c0_9 = arith.constant 0 : index
    %c0_10 = arith.constant 0 : index
    %2 = vector.load %arg4[%c0_7, %c0_8, %c0_9, %c0_10] : memref<1x4x1x1xf32, #tpu.memory_space<vmem>>, vector<1x4x1x1xf32>
    %cst = arith.constant dense<0.000000e+00> : vector<1x2x128xf32>
    %3 = vector.multi_reduction <add>, %0, %cst [1] : vector<1x4x2x128xf32> to vector<1x2x128xf32>
    %4 = vector.shape_cast %3 : vector<1x2x128xf32> to vector<1x1x2x128xf32>
    %cst_11 = arith.constant 2.500000e-01 : f32
    %5 = vector.broadcast %cst_11 : f32 to vector<1x1x2x128xf32>
    %6 = arith.mulf %4, %5 : vector<1x1x2x128xf32>
    %7 = arith.mulf %0, %0 : vector<1x4x2x128xf32>
    %cst_12 = arith.constant dense<0.000000e+00> : vector<1x2x128xf32>
    %8 = vector.multi_reduction <add>, %7, %cst_12 [1] : vector<1x4x2x128xf32> to vector<1x2x128xf32>
    %9 = vector.shape_cast %8 : vector<1x2x128xf32> to vector<1x1x2x128xf32>
    %cst_13 = arith.constant 2.500000e-01 : f32
    %10 = vector.broadcast %cst_13 : f32 to vector<1x1x2x128xf32>
    %11 = arith.mulf %9, %10 : vector<1x1x2x128xf32>
    %12 = arith.mulf %6, %6 : vector<1x1x2x128xf32>
    %13 = arith.subf %11, %12 : vector<1x1x2x128xf32>
    %cst_14 = arith.constant 0.000000e+00 : f32
    %14 = vector.broadcast %cst_14 : f32 to vector<1x1x2x128xf32>
    %15 = arith.maximumf %13, %14 : vector<1x1x2x128xf32>
    %cst_15 = arith.constant 9.99999974E-6 : f32
    %16 = vector.broadcast %cst_15 : f32 to vector<1x1x2x128xf32>
    %17 = arith.addf %15, %16 : vector<1x1x2x128xf32>
    %18 = math.rsqrt %17 : vector<1x1x2x128xf32>
    %19 = vector.broadcast %18 : vector<1x1x2x128xf32> to vector<1x4x2x128xf32>
    %20 = arith.mulf %0, %19 : vector<1x4x2x128xf32>
    %21 = arith.mulf %6, %18 : vector<1x1x2x128xf32>
    %22 = vector.broadcast %21 : vector<1x1x2x128xf32> to vector<1x4x2x128xf32>
    %23 = arith.subf %20, %22 : vector<1x4x2x128xf32>
    %24 = vector.broadcast %1 : vector<1x4x1x1xf32> to vector<1x4x2x128xf32>
    %25 = arith.mulf %23, %24 : vector<1x4x2x128xf32>
    %26 = vector.broadcast %2 : vector<1x4x1x1xf32> to vector<1x4x2x128xf32>
    %27 = arith.addf %25, %26 : vector<1x4x2x128xf32>
    %c0_16 = arith.constant 0 : index
    %c0_17 = arith.constant 0 : index
    %c0_18 = arith.constant 0 : index
    %c0_19 = arith.constant 0 : index
    %28 = vector.load %arg5[%c0_16, %c0_17, %c0_18, %c0_19] : memref<1x4x2x128xf32, #tpu.memory_space<vmem>>, vector<1x4x2x128xf32>
    tpu.vector_store %arg5[%c0_16, %c0_17, %c0_18, %c0_19], %27 {strides = array<i32>} : memref<1x4x2x128xf32, #tpu.memory_space<vmem>>, vector<1x4x2x128xf32>,
    return
  }
  func.func @transform_0(%arg0: i32, %arg1: i32) -> (i32, i32, i32, i32) {
    %c0_i32 = arith.constant 0 : i32
    %c0_i32_0 = arith.constant 0 : i32
    %c0_i32_1 = arith.constant 0 : i32
    return %arg0, %c0_i32, %arg1, %c0_i32_0 : i32, i32, i32, i32
  }
  func.func @transform_1(%arg0: i32, %arg1: i32) -> (i32, i32, i32, i32) {
    %c0_i32 = arith.constant 0 : i32
    %c0_i32_0 = arith.constant 0 : i32
    %c0_i32_1 = arith.constant 0 : i32
    %c0_i32_2 = arith.constant 0 : i32
    %c0_i32_3 = arith.constant 0 : i32
    return %c0_i32, %c0_i32_0, %c0_i32_1, %c0_i32_2 : i32, i32, i32, i32
  }
  func.func @transform_2(%arg0: i32, %arg1: i32) -> (i32, i32, i32, i32) {
    %c0_i32 = arith.constant 0 : i32
    %c0_i32_0 = arith.constant 0 : i32
    %c0_i32_1 = arith.constant 0 : i32
    %c0_i32_2 = arith.constant 0 : i32
    %c0_i32_3 = arith.constant 0 : i32
    return %c0_i32, %c0_i32_0, %c0_i32_1, %c0_i32_2 : i32, i32, i32, i32
  }
  func.func @transform_3(%arg0: i32, %arg1: i32) -> (i32, i32, i32, i32) {
    %c0_i32 = arith.constant 0 : i32
    %c0_i32_0 = arith.constant 0 : i32
    %c0_i32_1 = arith.constant 0 : i32
    return %arg0, %c0_i32, %arg1, %c0_i32_0 : i32, i32, i32, i32
  }
}

</mosaic_0001>

<llo_original>
// kernel: tpu_custom_call.1
$region0: #{tpu_custom_call.1}
  #allocation0 [shape = 'u32[]', space=smem, size = 0x4, offset = 0x4, fixed_abs, tag = 'smem constant byte address 0x4 - core index']
  #allocation1 [shape = 'u32[144,128]{1,0:T(1,128)}', space=vmem, size = 0x12000, scoped, tag = 'internal scratch']
  %s0 = inlined_call_operand.hbm [shape: f32[2,4,2,128], index: 0, kind: input, shape index: {}]
  %s1 = inlined_call_operand.vmem [shape: f32[1,4,1,1], index: 1, kind: input, shape index: {}]
  %s2 = inlined_call_operand.vmem [shape: f32[1,4,1,1], index: 2, kind: input, shape index: {}]
  %s3 = inlined_call_operand.hbm [shape: f32[2,4,2,128], index: 3, kind: output, shape index: {}]
  %s4 = sld [smem:[#allocation0]]
  $region49: #{tpu_custom_call.1} parent=0
    _
  %s6 = ssub.s32 1, %s4
  %s7 = scalar_select 0, %s6, %s4
  $region1: #{tpu_custom_call.1} parent=0
    #allocation2 [shape = 'u8[8192]{0}', space=vmem, size = 0x2000, scoped, tag = 'input window, operand 0']
    #allocation3 [shape = 's32[2]{0}', space=sflag, size = 0x8, scoped, tag = 'scoped memory for tpu_custom_call.1']
    #allocation4 [shape = 's32[2]{0}', space=sflag, size = 0x8, scoped, tag = 'scoped memory for tpu_custom_call.1']
    #allocation5 [shape = 'u8[8192]{0}', space=vmem, size = 0x2000, scoped, tag = 'output window, operand 0']
    %8 = vsyncpa [#allocation3], 0
    %s9 = scalar_lea.sflag [#allocation3], 1
    %10 = vsyncpa %s9, 0
    %11 = vsyncpa [#allocation4], 0
    %s12 = scalar_lea.sflag [#allocation4], 1
    %13 = vsyncpa %s12, 0
    loop: start=0, step=1, limit=4
    $region2: #{tpu_custom_call.1} parent=1 // loop_pre_header
      _
    $region3: #{tpu_custom_call.1} parent=1 // loop_header
      %s15 = sphi 0, %s19
      %p16 = scmp.ge.s32.totalorder %s15, 4
      %s22 = sphi 0, %s34
      %s23 = sphi 0, %s30
      %s24 = sphi 0, %s22
      %s25 = sphi 0, %s23
      %s26 = sphi 0, %s24
      %s27 = sphi 0, %s25
      %s39 = sphi 0, %s41
      %s42 = sphi 0, %s39
      %s43 = sphi 0, %s42
      %s59 = sphi 0, %s43
      %s63 = sphi 0, %s63
      %s65 = sphi 0, %s63
      %s66 = sphi 0, %s65
      %s80 = sphi 0, %s66
      %s84 = sphi 0, %s84
      %s86 = sphi 0, %s84
      %s87 = sphi 0, %s86
      %s101 = sphi 0, %s87
      %s109 = sphi 0, %s111
      %s112 = sphi 0, %s109
      %s113 = sphi 0, %s112
      %s129 = sphi 0, %s113
    $region4: #{tpu_custom_call.1} parent=1 // loop_header_branch
      %18 = sbr.rel (%p16) target = $region8
    $region5: #{tpu_custom_call.1} parent=1 // loop_body
      %s20 = ssub.s32 %s15, 1
      %s21 = ssub.s32 %s15, 2
      %s28 = sadd.s32 1, %s23
      %p29 = scmp.ge.s32.totalorder %s28, 1
      %s30 = scalar_select %p29, 0, %s28
      %s31 = sadd.s32 1, %s22
      %s32 = scalar_select %p29, %s31, %s22
      %p33 = scmp.ge.s32.totalorder %s32, 2
      %s34 = scalar_select %p33, 0, %s32
      %s35 = ssub.s32 %s22, %s34
      %s36 = ssub.s32 %s23, %s30
      %s37 = sor.u32 %s35, %s36
      %p38 = scmp.eq.s32.totalorder %s37, 0
      %s40 = sadd.s32 %s39, 1
      %s41 = scalar_select %p38, %s39, %s40
      %p44 = pneg %p38
      %p45 = scmp.eq.s32.totalorder %s15, 1
      %p46 = por %p44, %p45
      %p47 = scmp.ne.s32.totalorder %s39, %s42
      %p48 = scmp.eq.s32.totalorder %s15, 0
      %p49 = por %p47, %p48
      %p50 = scmp.ne.s32.totalorder %s39, %s42
      %p51 = scmp.eq.s32.totalorder %s20, 1
      %p52 = por %p50, %p51
      %p53 = scmp.ne.s32.totalorder %s42, %s43
      %p54 = scmp.eq.s32.totalorder %s20, 0
      %p55 = por %p53, %p54
      %p56 = scmp.ne.s32.totalorder %s42, %s43
      %p57 = scmp.eq.s32.totalorder %s21, 1
      %p58 = por %p56, %p57
      %p60 = scmp.ne.s32.totalorder %s43, %s59
      %p61 = scmp.eq.s32.totalorder %s21, 0
      %p62 = por %p60, %p61
      %s64 = sadd.s32 %s63, 1
      %p67 = scmp.eq.s32.totalorder %s15, 1
      %p68 = scmp.ne.s32.totalorder %s63, %s65
      %p69 = scmp.eq.s32.totalorder %s15, 0
      %p70 = por %p68, %p69
      %p71 = scmp.ne.s32.totalorder %s63, %s65
      %p72 = scmp.eq.s32.totalorder %s20, 1
      %p73 = por %p71, %p72
      %p74 = scmp.ne.s32.totalorder %s65, %s66
      %p75 = scmp.eq.s32.totalorder %s20, 0
      %p76 = por %p74, %p75
      %p77 = scmp.ne.s32.totalorder %s65, %s66
      %p78 = scmp.eq.s32.totalorder %s21, 1
      %p79 = por %p77, %p78
      %p81 = scmp.ne.s32.totalorder %s66, %s80
      %p82 = scmp.eq.s32.totalorder %s21, 0
      %p83 = por %p81, %p82
      %s85 = sadd.s32 %s84, 1
      %p88 = scmp.eq.s32.totalorder %s15, 1
      %p89 = scmp.ne.s32.totalorder %s84, %s86
      %p90 = scmp.eq.s32.totalorder %s15, 0
      %p91 = por %p89, %p90
      %p92 = scmp.ne.s32.totalorder %s84, %s86
      %p93 = scmp.eq.s32.totalorder %s20, 1
      %p94 = por %p92, %p93
      %p95 = scmp.ne.s32.totalorder %s86, %s87
      %p96 = scmp.eq.s32.totalorder %s20, 0
      %p97 = por %p95, %p96
      %p98 = scmp.ne.s32.totalorder %s86, %s87
      %p99 = scmp.eq.s32.totalorder %s21, 1
      %p100 = por %p98, %p99
      %p102 = scmp.ne.s32.totalorder %s87, %s101
      %p103 = scmp.eq.s32.totalorder %s21, 0
      %p104 = por %p102, %p103
      %s105 = ssub.s32 %s22, %s34
      %s106 = ssub.s32 %s23, %s30
      %s107 = sor.u32 %s105, %s106
      %p108 = scmp.eq.s32.totalorder %s107, 0
      %s110 = sadd.s32 %s109, 1
      %s111 = scalar_select %p108, %s109, %s110
      %p114 = pneg %p108
      %p115 = scmp.eq.s32.totalorder %s15, 1
      %p116 = por %p114, %p115
      %p117 = scmp.ne.s32.totalorder %s109, %s112
      %p118 = scmp.eq.s32.totalorder %s15, 0
      %p119 = por %p117, %p118
      %p120 = scmp.ne.s32.totalorder %s109, %s112
      %p121 = scmp.eq.s32.totalorder %s20, 1
      %p122 = por %p120, %p121
      %p123 = scmp.ne.s32.totalorder %s112, %s113
      %p124 = scmp.eq.s32.totalorder %s20, 0
      %p125 = por %p123, %p124
      %p126 = scmp.ne.s32.totalorder %s112, %s113
      %p127 = scmp.eq.s32.totalorder %s21, 1
      %p128 = por %p126, %p127
      %p130 = scmp.ne.s32.totalorder %s113, %s129
      %p131 = scmp.eq.s32.totalorder %s21, 0
      %p132 = por %p130, %p131
      %p133 = scmp.le.s32.totalorder 1, %s15
      %p134 = scmp.lt.s32.totalorder %s15, 3
      %p135 = pnand %p133, %p134
      %p136 = pneg %p135
      // Predicated region
      $region9: #{tpu_custom_call.1} parent=5 // pred_check
        _
      $region10: #{tpu_custom_call.1} parent=5 // pred_check_branch
        %138 = sbr.rel (%p135) target = $region12
      $region11: #{tpu_custom_call.1} parent=5 // pred_region
        %s139 = ssub.s32 %s15, 1
        // Predicated region
        $region13: #{tpu_custom_call.1} parent=11 // pred_check
          %p140 = pneg %p76
        $region14: #{tpu_custom_call.1} parent=11 // pred_check_branch
          %142 = sbr.rel (%p140) target = $region16
        $region15: #{tpu_custom_call.1} parent=11 // pred_region
          _
        $region16: #{tpu_custom_call.1} parent=11 // pred_fallthru
          _
        // Predicated region
        $region17: #{tpu_custom_call.1} parent=11 // pred_check
          %p143 = pneg %p97
        $region18: #{tpu_custom_call.1} parent=11 // pred_check_branch
          %145 = sbr.rel (%p143) target = $region20
        $region19: #{tpu_custom_call.1} parent=11 // pred_region
          _
        $region20: #{tpu_custom_call.1} parent=11 // pred_fallthru
          _
      $region12: #{tpu_custom_call.1} parent=5 // pred_fallthru
        _
      %p146 = scmp.lt.s32.totalorder %s15, 2
      // Predicated region
      $region21: #{tpu_custom_call.1} parent=5 // pred_check
        %p147 = pneg %p146
      $region22: #{tpu_custom_call.1} parent=5 // pred_check_branch
        %149 = sbr.rel (%p147) target = $region24
      $region23: #{tpu_custom_call.1} parent=5 // pred_region
        // Predicated region
        $region25: #{tpu_custom_call.1} parent=23 // pred_check
          %p150 = pneg %p49
        $region26: #{tpu_custom_call.1} parent=23 // pred_check_branch
          %152 = sbr.rel (%p150) target = $region28
        $region27: #{tpu_custom_call.1} parent=23 // pred_region
          %s153 = sand.u32 %s39, 1
          %s154 = scalar_lea.sflag [#allocation3], %s153
          %s155 = sand.u32 %s39, 1
          %s156 = smul.addr %s155, 8
          %s157 = scalar_lea.vmem [#allocation2], %s156
          %s159 = ssub.s32 128, 128
          %160 = vsyncadd %s154, %s159
          %s161 = smul.addr %s22, 4
          %s162 = sadd.s32 %s23, %s161
          %s163 = smul.addr %s162, 32
          %s164 = scalar_lea.hbm %s0, %s163
          %s165 = sshll.u32 %s157, 4
          %s166 = int_to_ptr.vmem [resolvable:$true] %s165
          %171 = dma.hbm_to_vmem [thread:$0]  %s164, 128, %s166, %s154, 32, 32, 2
        $region28: #{tpu_custom_call.1} parent=23 // pred_fallthru
          _
      $region24: #{tpu_custom_call.1} parent=5 // pred_fallthru
        _
      %p172 = scmp.le.s32.totalorder 1, %s15
      %p173 = scmp.lt.s32.totalorder %s15, 3
      %p174 = pnand %p172, %p173
      %p175 = pneg %p174
      // Predicated region
      $region29: #{tpu_custom_call.1} parent=5 // pred_check
        _
      $region30: #{tpu_custom_call.1} parent=5 // pred_check_branch
        %177 = sbr.rel (%p174) target = $region32
      $region31: #{tpu_custom_call.1} parent=5 // pred_region
        %s178 = ssub.s32 %s15, 1
        %s179 = sand.u32 %s42, 1
        %s180 = scalar_lea.sflag [#allocation3], %s179
        %s181 = sand.u32 %s42, 1
        %s182 = smul.addr %s181, 8
        %s183 = scalar_lea.vmem [#allocation2], %s182
        // Predicated region
        $region33: #{tpu_custom_call.1} parent=31 // pred_check
          %p184 = pneg %p55
        $region34: #{tpu_custom_call.1} parent=31 // pred_check_branch
          %186 = sbr.rel (%p184) target = $region36
        $region35: #{tpu_custom_call.1} parent=31 // pred_region
          %187 = dma.done %s180, 128
        $region36: #{tpu_custom_call.1} parent=31 // pred_fallthru
          _
        %s188 = sand.u32 %s42, 1
        %s189 = scalar_lea.sflag [#allocation3], %s188
        %s190 = sand.u32 %s42, 1
        %s191 = smul.addr %s190, 8
        %s192 = scalar_lea.vmem [#allocation2], %s191
        %p193 = pneg %p55
        %p194 = pneg %p52
        %p195 = pneg %p76
        %p196 = pneg %p73
        %p197 = pneg %p97
        %p198 = pneg %p94
        %p199 = pneg %p125
        %p200 = pneg %p122
        %s201 = sand.u32 %s112, 1
        %s202 = scalar_lea.sflag [#allocation4], %s201
        %s203 = sand.u32 %s112, 1
        %s204 = smul.addr %s203, 8
        %s205 = scalar_lea.vmem [#allocation5], %s204
        %v206 = vld [vmem:[%s183] sm:$0x3]
        %v207 = vld [vmem:[%s183 + $0x2] sm:$0x3]
        %v208 = vld [vmem:[%s183 + $0x4] sm:$0x3]
        %v209 = vld [vmem:[%s183 + $0x6] sm:$0x3]
        %v210 = vld [vmem:[%s1] sm:$0x1]
        %v211 = vld [vmem:[%s1 + $0x1] sm:$0x1]
        %v212 = vld [vmem:[%s1 + $0x2] sm:$0x1]
        %v213 = vld [vmem:[%s1 + $0x3] sm:$0x1]
        %v214 = vld [vmem:[%s2] sm:$0x1]
        %v215 = vld [vmem:[%s2 + $0x1] sm:$0x1]
        %v216 = vld [vmem:[%s2 + $0x2] sm:$0x1]
        %v217 = vld [vmem:[%s2 + $0x3] sm:$0x1]
        %vm218 = vcmask 1041408
        %v219 = vsel %vm218, %v206, 0.0
        %v220 = vsel %vm218, %v207, 0.0
        %v221 = vadd.f32 %v219, %v220
        %v222 = vsel %vm218, %v208, 0.0
        %v223 = vadd.f32 %v221, %v222
        %v224 = vsel %vm218, %v209, 0.0
        %v225 = vadd.f32 %v223, %v224
        %v226 = vmul.f32 %v225, 0.25
        %v227 = vmul.f32 %v206, %v206
        %v228 = vmul.f32 %v207, %v207
        %v229 = vmul.f32 %v208, %v208
        %v230 = vmul.f32 %v209, %v209
        %v231 = vsel %vm218, %v227, 0.0
        %v232 = vsel %vm218, %v228, 0.0
        %v233 = vadd.f32 %v231, %v232
        %v234 = vsel %vm218, %v229, 0.0
        %v235 = vadd.f32 %v233, %v234
        %v236 = vsel %vm218, %v230, 0.0
        %v237 = vadd.f32 %v235, %v236
        %v238 = vmul.f32 %v237, 0.25
        %v239 = vmul.f32 %v226, %v226
        %v240 = vsub.f32 %v238, %v239
        %v241 = vmax.f32 %v240, 0.0
        %v242 = vadd.f32 %v241, 1e-05
        %v243 = vrsqrt.pop %v242
        %v244 = vmul.f32 %v206, %v243
        %v245 = vmul.f32 %v207, %v243
        %v246 = vmul.f32 %v208, %v243
        %v247 = vmul.f32 %v209, %v243
        %v248 = vmul.f32 %v226, %v243
        %v249 = vsub.f32 %v244, %v248
        %v250 = vsub.f32 %v245, %v248
        %v251 = vsub.f32 %v246, %v248
        %v252 = vsub.f32 %v247, %v248
        %v257 = vlaneseq
        %v258 = vshrl.u32 %v257, 7
        %v259 = vsub.s32 0, %v258
        %v260 = vrot.slane %v210, %v259
        %v261 = vlaneseq
        %v262 = vshrl.u32 %v261, 7
        %v263 = vsub.s32 0, %v262
        %v264 = vrot.slane %v211, %v263
        %v265 = vlaneseq
        %v266 = vshrl.u32 %v265, 7
        %v267 = vsub.s32 0, %v266
        %v268 = vrot.slane %v212, %v267
        %v269 = vlaneseq
        %v270 = vshrl.u32 %v269, 7
        %v271 = vsub.s32 0, %v270
        %v272 = vrot.slane %v213, %v271
        %273 = vset.pattern.permute.xlu0 0
        %274 = vperm.xlu0 %273, %v260
        %v275 = vpop.permute.xlu0 %274
        %277 = vset.pattern.permute.xlu0 0
        %278 = vperm.xlu0 %277, %v264
        %v279 = vpop.permute.xlu0 %278
        %281 = vset.pattern.permute.xlu0 0
        %282 = vperm.xlu0 %281, %v268
        %v283 = vpop.permute.xlu0 %282
        %285 = vset.pattern.permute.xlu0 0
        %286 = vperm.xlu0 %285, %v272
        %v287 = vpop.permute.xlu0 %286
        %v289 = vmul.f32 %v249, %v275
        %v290 = vmul.f32 %v250, %v279
        %v291 = vmul.f32 %v251, %v283
        %v292 = vmul.f32 %v252, %v287
        %v297 = vlaneseq
        %v298 = vshrl.u32 %v297, 7
        %v299 = vsub.s32 0, %v298
        %v300 = vrot.slane %v214, %v299
        %v301 = vlaneseq
        %v302 = vshrl.u32 %v301, 7
        %v303 = vsub.s32 0, %v302
        %v304 = vrot.slane %v215, %v303
        %v305 = vlaneseq
        %v306 = vshrl.u32 %v305, 7
        %v307 = vsub.s32 0, %v306
        %v308 = vrot.slane %v216, %v307
        %v309 = vlaneseq
        %v310 = vshrl.u32 %v309, 7
        %v311 = vsub.s32 0, %v310
        %v312 = vrot.slane %v217, %v311
        %313 = vset.pattern.permute.xlu0 0
        %314 = vperm.xlu0 %313, %v300
        %v315 = vpop.permute.xlu0 %314
        %317 = vset.pattern.permute.xlu0 0
        %318 = vperm.xlu0 %317, %v304
        %v319 = vpop.permute.xlu0 %318
        %321 = vset.pattern.permute.xlu0 0
        %322 = vperm.xlu0 %321, %v308
        %v323 = vpop.permute.xlu0 %322
        %325 = vset.pattern.permute.xlu0 0
        %326 = vperm.xlu0 %325, %v312
        %v327 = vpop.permute.xlu0 %326
        %v329 = vadd.f32 %v289, %v315
        %v330 = vadd.f32 %v290, %v319
        %v331 = vadd.f32 %v291, %v323
        %v332 = vadd.f32 %v292, %v327
        %333 = vst [vmem:[%s205] sm:$0x3] %v329
        %334 = vst [vmem:[%s205 + $0x2] sm:$0x3] %v330
        %335 = vst [vmem:[%s205 + $0x4] sm:$0x3] %v331
        %336 = vst [vmem:[%s205 + $0x6] sm:$0x3] %v332
        %s337 = sand.u32 %s112, 1
        %s338 = scalar_lea.sflag [#allocation4], %s337
        %s339 = sand.u32 %s112, 1
        %s340 = smul.addr %s339, 8
        %s341 = scalar_lea.vmem [#allocation5], %s340
        // Predicated region
        $region37: #{tpu_custom_call.1} parent=31 // pred_check
          %p342 = pneg %p122
        $region38: #{tpu_custom_call.1} parent=31 // pred_check_branch
          %344 = sbr.rel (%p342) target = $region40
        $region39: #{tpu_custom_call.1} parent=31 // pred_region
          %s346 = ssub.s32 128, 128
          %347 = vsyncadd %s338, %s346
          %s348 = smul.addr %s24, 4
          %s349 = sadd.s32 %s25, %s348
          %s350 = smul.addr %s349, 32
          %s351 = scalar_lea.hbm %s3, %s350
          %s352 = sshll.u32 %s341, 4
          %s353 = int_to_ptr.vmem [resolvable:$true] %s352
          %358 = dma.vmem_to_hbm [thread:$0]  %s353, 128, %s351, %s338, 32, 32, 2
        $region40: #{tpu_custom_call.1} parent=31 // pred_fallthru
          _
      $region32: #{tpu_custom_call.1} parent=5 // pred_fallthru
        _
      %p359 = scmp.le.s32.totalorder 2, %s15
      // Predicated region
      $region41: #{tpu_custom_call.1} parent=5 // pred_check
        %p360 = pneg %p359
      $region42: #{tpu_custom_call.1} parent=5 // pred_check_branch
        %362 = sbr.rel (%p360) target = $region44
      $region43: #{tpu_custom_call.1} parent=5 // pred_region
        %s363 = ssub.s32 %s15, 2
        // Predicated region
        $region45: #{tpu_custom_call.1} parent=43 // pred_check
          %p364 = pneg %p128
        $region46: #{tpu_custom_call.1} parent=43 // pred_check_branch
          %366 = sbr.rel (%p364) target = $region48
        $region47: #{tpu_custom_call.1} parent=43 // pred_region
          %s367 = sand.u32 %s113, 1
          %s368 = scalar_lea.sflag [#allocation4], %s367
          %s369 = sand.u32 %s113, 1
          %s370 = smul.addr %s369, 8
          %s371 = scalar_lea.vmem [#allocation5], %s370
          %372 = dma.done %s368, 128
        $region48: #{tpu_custom_call.1} parent=43 // pred_fallthru
          _
      $region44: #{tpu_custom_call.1} parent=5 // pred_fallthru
        _
    $region6: #{tpu_custom_call.1} parent=1 // loop_footer
      %s19 = sadd.s32 1, %s15
    $region7: #{tpu_custom_call.1} parent=1 // loop_footer_branch
      %14 = sbr.rel target = $region3
    $region8: #{tpu_custom_call.1} parent=1 // loop_exit
      _
    %373 = vsyncpa [#allocation3], 1
    %s374 = scalar_lea.sflag [#allocation3], 1
    %375 = vsyncpa %s374, 1
    %376 = vsyncpa [#allocation4], 1
    %s377 = scalar_lea.sflag [#allocation4], 1
    %378 = vsyncpa %s377, 1

</llo_original>
